<compile_context>
chip_gen: v5e
topology: v5e:2x2
jax: 0.10.0
libtpu: 0.0.40
codegen_flags: <defaults>
</compile_context>

<pallas_src>
import jax
import jax.numpy as jnp
from jax.experimental import pallas as pl
from jax.experimental.pallas import tpu as pltpu

S3GEN_SR = 24000
MEL_HOP = S3GEN_SR // 50          # 480 samples / mel frame (HiFT 8*5*3 upsample * iSTFT hop 4)
N_TRIM = S3GEN_SR // 50           # trim_fade = 2 * N_TRIM samples = first 2 mel frames

# small synthetic config (stands in for output_size=512, linear_units=2048, ...)
VOCAB = 64
D_MODEL = 128                     # lane-dense hidden
D_FF = 256
N_MELS = 80
N_MELS_PAD = 128                  # mel channels carried lane-dense
HOP_PAD = 512                     # 480 -> 512 lane-dense synthesis output (trimmed in wrapper)
XVEC_DIM = 192                    # CAMPPlus x-vector dim

TM_TOK_MAX = 256                  # token frames per time tile (mel tile = 2x this)


def _round_up(n, m):
    return ((n + m - 1) // m) * m


def _pad_to(a, shape):
    return jnp.pad(a, [(0, s - d) for d, s in zip(a.shape, shape)])


# ---------------------------------------------------------------------------
# Pallas kernels
# ---------------------------------------------------------------------------
def _flow_kernel(x_ref, w1_ref, b1_ref, w2_ref, b2_ref, wm_ref, bm_ref, spk_ref, o_ref):
    # Fused: conformer-FF stand-in (x + W2 gelu(W1 x + b1) + b2) -> mel head -> +spk,
    # then 2x time upsample written as [m | m] on lanes (host reshape interleaves).
    x = x_ref[0]                                                     # (TM, D) f32
    xb = x.astype(jnp.bfloat16)
    h = jnp.dot(xb, w1_ref[...], preferred_element_type=jnp.float32) + b1_ref[...]
    h = jax.nn.gelu(h, approximate=True)                             # TODO(synk): PyTorch default GELU is exact
    y = x + jnp.dot(h.astype(jnp.bfloat16), w2_ref[...],
                    preferred_element_type=jnp.float32) + b2_ref[...]
    m = jnp.dot(y.astype(jnp.bfloat16), wm_ref[...],
                preferred_element_type=jnp.float32) + bm_ref[...] + spk_ref[0]
    o_ref[0] = jnp.concatenate([m, m], axis=-1)                      # (TM, 2*128)


def _mel2wav_kernel(x_ref, halo_ref, wc_ref, bc_ref, wup_ref, bup_ref, fade_ref, o_ref):
    # Fused HiFT stand-in: causal conv(k=3) as ONE stacked matmul (K=3*128), leaky-relu,
    # per-frame 128->512 synthesis matmul, tanh, and trim_fade on the first 2 mel frames.
    j = pl.program_id(1)
    x = x_ref[0]                                                     # (TM, 128) f32
    tm = x.shape[0]
    halo = halo_ref[0, 6:8, :]                                       # rows t-2, t-1 of this tile
    halo = jnp.where(j == 0, 0.0, halo)                              # causal zero pad at start
    xp = jnp.concatenate([halo, x], axis=0)                          # (TM+2, 128)
    xs = jnp.concatenate([xp[0:tm], xp[1:tm + 1], xp[2:tm + 2]], axis=-1)   # (TM, 384)
    c = jnp.dot(xs.astype(jnp.bfloat16), wc_ref[...],
                preferred_element_type=jnp.float32) + bc_ref[...]
    c = jnp.where(c > 0, c, 0.1 * c)                                 # leaky_relu(0.1)
    y = jnp.dot(c.astype(jnp.bfloat16), wup_ref[...],
                preferred_element_type=jnp.float32) + bup_ref[...]
    y = jnp.tanh(y)                                                  # (TM, 512)
    o_ref[0] = y

    @pl.when(j == 0)
    def _():
        # trim_fade only touches the first 2 mel frames (2*480 samples) of the utterance
        o_ref[0, 0:2, :] = y[0:2, :] * fade_ref[...]


# ---------------------------------------------------------------------------
# pallas_call wrappers
# ---------------------------------------------------------------------------
def flow_tokens_to_mels(emb, spk_p, params, tm_tok):
    B, T_pad, D = emb.shape
    nt = T_pad // tm_tok
    out = pl.pallas_call(
        _flow_kernel,
        out_shape=jax.ShapeDtypeStruct((B, T_pad, 2 * N_MELS_PAD), jnp.float32),
        grid=(B, nt),
        in_specs=[
            pl.BlockSpec((1, tm_tok, D), lambda b, j: (b, j, 0)),
            pl.BlockSpec((D, D_FF), lambda b, j: (0, 0)),
            pl.BlockSpec((1, D_FF), lambda b, j: (0, 0)),
            pl.BlockSpec((D_FF, D), lambda b, j: (0, 0)),
            pl.BlockSpec((1, D), lambda b, j: (0, 0)),
            pl.BlockSpec((D, N_MELS_PAD), lambda b, j: (0, 0)),
            pl.BlockSpec((1, N_MELS_PAD), lambda b, j: (0, 0)),
            pl.BlockSpec((1, 1, N_MELS_PAD), lambda b, j: (b, 0, 0)),
        ],
        out_specs=pl.BlockSpec((1, tm_tok, 2 * N_MELS_PAD), lambda b, j: (b, j, 0)),
        compiler_params=pltpu.CompilerParams(
            dimension_semantics=("parallel", "parallel")),
    )(emb, params["w1"], params["b1"], params["w2"], params["b2"],
      params["w_mel"], params["b_mel"], spk_p)
    # (B, T_pad, 2*128) -> (B, 2*T_pad, 128): contiguous reshape = interleaved 2x repeat
    return out.reshape(B, 2 * T_pad, N_MELS_PAD)


def mel2wav(mels_pad, params, fade2, tm_mel):
    B, T_mel_pad, C = mels_pad.shape
    nt = T_mel_pad // tm_mel
    hb = tm_mel // 8                         # halo step in units of 8-row blocks
    return pl.pallas_call(
        _mel2wav_kernel,
        out_shape=jax.ShapeDtypeStruct((B, T_mel_pad, HOP_PAD), jnp.float32),
        grid=(B, nt),
        in_specs=[
            pl.BlockSpec((1, tm_mel, C), lambda b, j: (b, j, 0)),
            # 8-row halo block ending just before this tile (clamped at j==0, zeroed in-kernel)
            pl.BlockSpec((1, 8, C), lambda b, j: (b, jnp.maximum(j * hb - 1, 0), 0)),
            pl.BlockSpec((3 * C, C), lambda b, j: (0, 0)),
            pl.BlockSpec((1, C), lambda b, j: (0, 0)),
            pl.BlockSpec((C, HOP_PAD), lambda b, j: (0, 0)),
            pl.BlockSpec((1, HOP_PAD), lambda b, j: (0, 0)),
            pl.BlockSpec((2, HOP_PAD), lambda b, j: (0, 0)),
        ],
        out_specs=pl.BlockSpec((1, tm_mel, HOP_PAD), lambda b, j: (b, j, 0)),
        compiler_params=pltpu.CompilerParams(
            dimension_semantics=("parallel", "parallel")),
    )(mels_pad, mels_pad, params["w_conv"], params["b_conv"],
      params["w_up"], params["b_up"], fade2)


# ---------------------------------------------------------------------------
# Parameters / buffers
# ---------------------------------------------------------------------------
def make_params(key):
    ks = jax.random.split(key, 8)
    s = 0.05
    embed = jax.random.normal(ks[0], (VOCAB, D_MODEL), jnp.float32) * s
    w1 = jax.random.normal(ks[1], (D_MODEL, D_FF), jnp.float32) * s
    w2 = jax.random.normal(ks[2], (D_FF, D_MODEL), jnp.float32) * s
    w_spk = jax.random.normal(ks[3], (XVEC_DIM, N_MELS), jnp.float32) * s
    w_mel = jax.random.normal(ks[4], (D_MODEL, N_MELS), jnp.float32) * s
    w_conv = jax.random.normal(ks[5], (3, N_MELS, N_MELS), jnp.float32) * s
    w_up = jax.random.normal(ks[6], (N_MELS, MEL_HOP), jnp.float32) * s

    # lane-dense padded / tap-stacked, bf16 MXU operands (f32 accumulation in-kernel)
    w_mel_p = _pad_to(w_mel, (D_MODEL, N_MELS_PAD)).astype(jnp.bfloat16)
    wc = jnp.zeros((3, N_MELS_PAD, N_MELS_PAD), jnp.float32)
    wc = wc.at[:, :N_MELS, :N_MELS].set(w_conv)
    wc = wc.reshape(3 * N_MELS_PAD, N_MELS_PAD).astype(jnp.bfloat16)   # taps t-2, t-1, t stacked on K
    w_up_p = _pad_to(w_up, (N_MELS_PAD, HOP_PAD)).astype(jnp.bfloat16)

    return dict(
        embed=embed,
        w1=w1.astype(jnp.bfloat16), b1=jnp.zeros((1, D_FF), jnp.float32),
        w2=w2.astype(jnp.bfloat16), b2=jnp.zeros((1, D_MODEL), jnp.float32),
        w_spk=w_spk,
        w_mel=w_mel_p, b_mel=jnp.zeros((1, N_MELS_PAD), jnp.float32),
        w_conv=wc, b_conv=jnp.zeros((1, N_MELS_PAD), jnp.float32),
        w_up=w_up_p, b_up=jnp.zeros((1, HOP_PAD), jnp.float32),
    )


def make_fade_frames():
    # trim_fade = zeros(2*n); fade[n:] = (cos(linspace(pi, 0, n)) + 1) / 2  -> first 2 frames only
    fade = jnp.zeros((2 * N_TRIM,), jnp.float32)
    ramp = (jnp.cos(jnp.linspace(jnp.pi, 0.0, N_TRIM)) + 1.0) / 2.0
    fade = fade.at[N_TRIM:].set(ramp.astype(jnp.float32))
    f2 = jnp.ones((2, HOP_PAD), jnp.float32)
    return f2.at[:, :MEL_HOP].set(fade.reshape(2, MEL_HOP))


# ---------------------------------------------------------------------------
# Forward pass (mirrors SpeechTokensToWav.forward with ref_dict provided)
# ---------------------------------------------------------------------------
def speech_tokens_to_wav(speech_tokens, params, ref_dict):
    B, T = speech_tokens.shape

    # time tiling: tile token axis (mel tile = 2x, wav tile = 960x)
    tm_tok = min(TM_TOK_MAX, _round_up(T, 8))
    T_pad = _round_up(T, tm_tok)
    tok_pad = jnp.pad(speech_tokens, ((0, 0), (0, T_pad - T)))

    # --- flow: tokens -> mels -----------------------------------------------
    # TODO(synk): UpsampleConformerEncoder (6 rel-pos attention blocks) + CausalConditionalCFM
    #             ODE sampler reduced to one fused MLP+mel-head kernel; 25 Hz tokens -> 50 Hz
    #             mel frames, 80 mel bins (carried as 128 lanes) as in the real flow.
    # TODO(synk): token-embedding gather kept as an XLA gather; could be folded into the flow
    #             kernel via PrefetchScalarGridSpec row-gather.
    emb = params["embed"][tok_pad]                                    # (B, T_pad, D)
    spk80 = ref_dict["embedding"] @ params["w_spk"]                   # (B, 80) CFM spk conditioning
    spk_p = _pad_to(spk80, (B, N_MELS_PAD))[:, None, :]               # (B, 1, 128)
    mels_pad = flow_tokens_to_mels(emb, spk_p, params, tm_tok)        # (B, 2*T_pad, 128)
    mels = mels_pad[:, :2 * T, :N_MELS]                               # (B, 2T, 80)

    # --- mel2wav (HiFTGenerator stand-in) ------------------------------------
    # TODO(synk): HiFT's F0 predictor, NSF source module, resblocks and iSTFT head reduced to
    #             causal-conv + per-frame 80->480 synthesis (total upsample 480 = 8*5*3*4).
    fade2 = make_fade_frames()                                        # (2, 512)
    frames = mel2wav(mels_pad, params, fade2, 2 * tm_tok)             # (B, 2*T_pad, 512)
    wav = frames[:, :2 * T, :MEL_HOP].reshape(B, 2 * T * MEL_HOP)     # trim lane pad + flatten
    return wav, mels


if __name__ == "__main__":
    key = jax.random.PRNGKey(0)
    k_tok, k_xvec, k_par = jax.random.split(key, 3)

    B, T = 2, 8                                                       # small shapes
    speech_tokens = jax.random.randint(k_tok, (B, T), 0, VOCAB, dtype=jnp.int32)
    ref_dict = {"embedding": jax.random.normal(k_xvec, (B, XVEC_DIM), jnp.float32) * 0.1}
    params = make_params(k_par)

    wav, mels = speech_tokens_to_wav(speech_tokens, params, ref_dict)
    jax.block_until_ready(wav)

    assert mels.shape == (B, 2 * T, N_MELS)
    assert wav.shape == (B, 2 * T * MEL_HOP)
    assert bool(jnp.all(jnp.isfinite(wav)))
    print("KERNEL_OK")
</pallas_src>

<mosaic_0001>
module attributes {stable_mosaic.version = 11 : i64} {
  func.func @_flow_kernel(%arg0: i32, %arg1: i32, %arg2: memref<1x8x128xf32, #tpu.memory_space<vmem>>, %arg3: memref<128x256xbf16, #tpu.memory_space<vmem>>, %arg4: memref<1x256xf32, #tpu.memory_space<vmem>>, %arg5: memref<256x128xbf16, #tpu.memory_space<vmem>>, %arg6: memref<1x128xf32, #tpu.memory_space<vmem>>, %arg7: memref<128x128xbf16, #tpu.memory_space<vmem>>, %arg8: memref<1x128xf32, #tpu.memory_space<vmem>>, %arg9: memref<1x1x128xf32, #tpu.memory_space<vmem>>, %arg10: memref<1x8x256xf32, #tpu.memory_space<vmem>>) attributes {dimension_semantics = [#tpu.dimension_semantics<parallel>, #tpu.dimension_semantics<parallel>], iteration_bounds = array<i64: 2, 1>, scalar_prefetch = 0 : i64, scratch_operands = 0 : i64, tpu.core_type = #tpu.core_type<tc>, window_params = [{transform_indices = @transform_0, window_bounds = array<i64: 1, 8, 128>}, {pipeline_mode = #tpu.pipeline_mode<synchronous>, transform_indices = @transform_1, window_bounds = array<i64: 128, 256>}, {pipeline_mode = #tpu.pipeline_mode<synchronous>, transform_indices = @transform_2, window_bounds = array<i64: 1, 256>}, {pipeline_mode = #tpu.pipeline_mode<synchronous>, transform_indices = @transform_3, window_bounds = array<i64: 256, 128>}, {pipeline_mode = #tpu.pipeline_mode<synchronous>, transform_indices = @transform_4, window_bounds = array<i64: 1, 128>}, {pipeline_mode = #tpu.pipeline_mode<synchronous>, transform_indices = @transform_5, window_bounds = array<i64: 128, 128>}, {pipeline_mode = #tpu.pipeline_mode<synchronous>, transform_indices = @transform_6, window_bounds = array<i64: 1, 128>}, {transform_indices = @transform_7, window_bounds = array<i64: 1, 1, 128>}, {transform_indices = @transform_8, window_bounds = array<i64: 1, 8, 256>}]} {
    %c0 = arith.constant 0 : index
    %c0_0 = arith.constant 0 : index
    %c0_1 = arith.constant 0 : index
    %0 = vector.load %arg2[%c0, %c0_0, %c0_1] : memref<1x8x128xf32, #tpu.memory_space<vmem>>, vector<1x8x128xf32>
    %1 = vector.shape_cast %0 : vector<1x8x128xf32> to vector<8x128xf32>
    %2 = arith.truncf %1 : vector<8x128xf32> to vector<8x128xbf16>
    %c0_2 = arith.constant 0 : index
    %c0_3 = arith.constant 0 : index
    %3 = vector.load %arg3[%c0_2, %c0_3] : memref<128x256xbf16, #tpu.memory_space<vmem>>, vector<128x256xbf16>
    %cst = arith.constant dense<0.000000e+00> : vector<8x256xf32>
    %4 = tpu.matmul %2, %3, %cst {dimension_numbers = #tpu.dot_dimension_numbers<[1], [0], [0], [1], [0, 0, 1, 1], [], []>} : vector<8x128xbf16>, vector<128x256xbf16>, vector<8x256xf32> -> vector<8x256xf32>
    %c0_4 = arith.constant 0 : index
    %c0_5 = arith.constant 0 : index
    %5 = vector.load %arg4[%c0_4, %c0_5] : memref<1x256xf32, #tpu.memory_space<vmem>>, vector<1x256xf32>
    %6 = vector.broadcast %5 : vector<1x256xf32> to vector<8x256xf32>
    %7 = arith.addf %4, %6 : vector<8x256xf32>
    %8 = arith.mulf %7, %7 : vector<8x256xf32>
    %9 = arith.mulf %7, %8 : vector<8x256xf32>
    %cst_6 = arith.constant 4.471500e-02 : f32
    %10 = vector.broadcast %cst_6 : f32 to vector<8x256xf32>
    %11 = arith.mulf %10, %9 : vector<8x256xf32>
    %12 = arith.addf %7, %11 : vector<8x256xf32>
    %cst_7 = arith.constant 0.797884583 : f32
    %13 = vector.broadcast %cst_7 : f32 to vector<8x256xf32>
    %14 = arith.mulf %13, %12 : vector<8x256xf32>
    %15 = math.tanh %14 : vector<8x256xf32>
    %cst_8 = arith.constant 1.000000e+00 : f32
    %16 = vector.broadcast %cst_8 : f32 to vector<8x256xf32>
    %17 = arith.addf %16, %15 : vector<8x256xf32>
    %cst_9 = arith.constant 5.000000e-01 : f32
    %18 = vector.broadcast %cst_9 : f32 to vector<8x256xf32>
    %19 = arith.mulf %18, %17 : vector<8x256xf32>
    %20 = arith.mulf %7, %19 : vector<8x256xf32>
    %21 = arith.truncf %20 : vector<8x256xf32> to vector<8x256xbf16>
    %c0_10 = arith.constant 0 : index
    %c0_11 = arith.constant 0 : index
    %22 = vector.load %arg5[%c0_10, %c0_11] : memref<256x128xbf16, #tpu.memory_space<vmem>>, vector<256x128xbf16>
    %cst_12 = arith.constant dense<0.000000e+00> : vector<8x128xf32>
    %23 = tpu.matmul %21, %22, %cst_12 {dimension_numbers = #tpu.dot_dimension_numbers<[1], [0], [0], [1], [0, 0, 1, 1], [], []>} : vector<8x256xbf16>, vector<256x128xbf16>, vector<8x128xf32> -> vector<8x128xf32>
    %24 = arith.addf %1, %23 : vector<8x128xf32>
    %c0_13 = arith.constant 0 : index
    %c0_14 = arith.constant 0 : index
    %25 = vector.load %arg6[%c0_13, %c0_14] : memref<1x128xf32, #tpu.memory_space<vmem>>, vector<1x128xf32>
    %26 = vector.broadcast %25 : vector<1x128xf32> to vector<8x128xf32>
    %27 = arith.addf %24, %26 : vector<8x128xf32>
    %28 = arith.truncf %27 : vector<8x128xf32> to vector<8x128xbf16>
    %c0_15 = arith.constant 0 : index
    %c0_16 = arith.constant 0 : index
    %29 = vector.load %arg7[%c0_15, %c0_16] : memref<128x128xbf16, #tpu.memory_space<vmem>>, vector<128x128xbf16>
    %cst_17 = arith.constant dense<0.000000e+00> : vector<8x128xf32>
    %30 = tpu.matmul %28, %29, %cst_17 {dimension_numbers = #tpu.dot_dimension_numbers<[1], [0], [0], [1], [0, 0, 1, 1], [], []>} : vector<8x128xbf16>, vector<128x128xbf16>, vector<8x128xf32> -> vector<8x128xf32>
    %c0_18 = arith.constant 0 : index
    %c0_19 = arith.constant 0 : index
    %31 = vector.load %arg8[%c0_18, %c0_19] : memref<1x128xf32, #tpu.memory_space<vmem>>, vector<1x128xf32>
    %32 = vector.broadcast %31 : vector<1x128xf32> to vector<8x128xf32>
    %33 = arith.addf %30, %32 : vector<8x128xf32>
    %c0_20 = arith.constant 0 : index
    %c0_21 = arith.constant 0 : index
    %c0_22 = arith.constant 0 : index
    %34 = vector.load %arg9[%c0_20, %c0_21, %c0_22] : memref<1x1x128xf32, #tpu.memory_space<vmem>>, vector<1x1x128xf32>
    %35 = vector.shape_cast %34 : vector<1x1x128xf32> to vector<1x128xf32>
    %36 = vector.broadcast %35 : vector<1x128xf32> to vector<8x128xf32>
    %37 = arith.addf %33, %36 : vector<8x128xf32>
    %38 = tpu.concatenate %37, %37 in 1 : vector<8x128xf32>, vector<8x128xf32> -> vector<8x256xf32>
    %c0_23 = arith.constant 0 : index
    %c0_24 = arith.constant 0 : index
    %c0_25 = arith.constant 0 : index
    %39 = vector.load %arg10[%c0_23, %c0_24, %c0_25] : memref<1x8x256xf32, #tpu.memory_space<vmem>>, vector<1x8x256xf32>
    %40 = vector.shape_cast %39 : vector<1x8x256xf32> to vector<8x256xf32>
    %41 = vector.shape_cast %38 : vector<8x256xf32> to vector<1x8x256xf32>
    tpu.vector_store %arg10[%c0_23, %c0_24, %c0_25], %41 {strides = array<i32>} : memref<1x8x256xf32, #tpu.memory_space<vmem>>, vector<1x8x256xf32>,
    return
  }
  func.func @transform_0(%arg0: i32, %arg1: i32) -> (i32, i32, i32) {
    %c0_i32 = arith.constant 0 : i32
    %c0_i32_0 = arith.constant 0 : i32
    return %arg0, %arg1, %c0_i32 : i32, i32, i32
  }
  func.func @transform_1(%arg0: i32, %arg1: i32) -> (i32, i32) {
    %c0_i32 = arith.constant 0 : i32
    %c0_i32_0 = arith.constant 0 : i32
    %c0_i32_1 = arith.constant 0 : i32
    return %c0_i32, %c0_i32_0 : i32, i32
  }
  func.func @transform_2(%arg0: i32, %arg1: i32) -> (i32, i32) {
    %c0_i32 = arith.constant 0 : i32
    %c0_i32_0 = arith.constant 0 : i32
    %c0_i32_1 = arith.constant 0 : i32
    return %c0_i32, %c0_i32_0 : i32, i32
  }
  func.func @transform_3(%arg0: i32, %arg1: i32) -> (i32, i32) {
    %c0_i32 = arith.constant 0 : i32
    %c0_i32_0 = arith.constant 0 : i32
    %c0_i32_1 = arith.constant 0 : i32
    return %c0_i32, %c0_i32_0 : i32, i32
  }
  func.func @transform_4(%arg0: i32, %arg1: i32) -> (i32, i32) {
    %c0_i32 = arith.constant 0 : i32
    %c0_i32_0 = arith.constant 0 : i32
    %c0_i32_1 = arith.constant 0 : i32
    return %c0_i32, %c0_i32_0 : i32, i32
  }
  func.func @transform_5(%arg0: i32, %arg1: i32) -> (i32, i32) {
    %c0_i32 = arith.constant 0 : i32
    %c0_i32_0 = arith.constant 0 : i32
    %c0_i32_1 = arith.constant 0 : i32
    return %c0_i32, %c0_i32_0 : i32, i32
  }
  func.func @transform_6(%arg0: i32, %arg1: i32) -> (i32, i32) {
    %c0_i32 = arith.constant 0 : i32
    %c0_i32_0 = arith.constant 0 : i32
    %c0_i32_1 = arith.constant 0 : i32
    return %c0_i32, %c0_i32_0 : i32, i32
  }
  func.func @transform_7(%arg0: i32, %arg1: i32) -> (i32, i32, i32) {
    %c0_i32 = arith.constant 0 : i32
    %c0_i32_0 = arith.constant 0 : i32
    %c0_i32_1 = arith.constant 0 : i32
    return %arg0, %c0_i32, %c0_i32_0 : i32, i32, i32
  }
  func.func @transform_8(%arg0: i32, %arg1: i32) -> (i32, i32, i32) {
    %c0_i32 = arith.constant 0 : i32
    %c0_i32_0 = arith.constant 0 : i32
    return %arg0, %arg1, %c0_i32 : i32, i32, i32
  }
}

</mosaic_0001>

<llo_original>
// kernel: tpu_custom_call.1
$region0: #{tpu_custom_call.1}
  #allocation0 [shape = 'u32[]', space=smem, size = 0x4, offset = 0x4, fixed_abs, tag = 'smem constant byte address 0x4 - core index']
  #allocation1 [shape = 'u32[72,128]{1,0:T(1,128)}', space=vmem, size = 0x9000, scoped, tag = 'internal scratch']
  %s0 = inlined_call_operand.hbm [shape: f32[2,8,128], index: 0, kind: input, shape index: {}]
  %s1 = inlined_call_operand.hbm [shape: bf16[128,256], index: 1, kind: input, shape index: {}]
  %s2 = inlined_call_operand.hbm [shape: f32[1,256], index: 2, kind: input, shape index: {}]
  %s3 = inlined_call_operand.hbm [shape: bf16[256,128], index: 3, kind: input, shape index: {}]
  %s4 = inlined_call_operand.vmem [shape: f32[1,128], index: 4, kind: input, shape index: {}]
  %s5 = inlined_call_operand.hbm [shape: bf16[128,128], index: 5, kind: input, shape index: {}]
  %s6 = inlined_call_operand.vmem [shape: f32[1,128], index: 6, kind: input, shape index: {}]
  %s7 = inlined_call_operand.vmem [shape: f32[2,1,128], index: 7, kind: input, shape index: {}]
  %s8 = inlined_call_operand.hbm [shape: f32[2,8,256], index: 8, kind: output, shape index: {}]
  %s9 = sld [smem:[#allocation0]]
  $region85: #{tpu_custom_call.1} parent=0
    _
  %s11 = ssub.s32 1, %s9
  %s12 = scalar_select 0, %s11, %s9
  $region1: #{tpu_custom_call.1} parent=0
    #allocation2 [shape = 'u8[8192]{0}', space=vmem, size = 0x2000, scoped, tag = 'input window, operand 0']
    #allocation3 [shape = 's32[2]{0}', space=sflag, size = 0x8, scoped, tag = 'scoped memory for tpu_custom_call.1']
    #allocation4 [shape = 's32[2]{0}', space=sflag, size = 0x8, scoped, tag = 'scoped memory for tpu_custom_call.1']
    #allocation5 [shape = 'u8[65536]{0}', space=vmem, size = 0x10000, scoped, tag = 'input window, operand 1, single buffered']
    #allocation6 [shape = 's32[1]{0}', space=sflag, size = 0x4, scoped, tag = 'scoped memory for tpu_custom_call.1']
    #allocation7 [shape = 'u8[1024]{0}', space=vmem, size = 0x400, scoped, tag = 'input window, operand 2, single buffered']
    #allocation8 [shape = 'u8[65536]{0}', space=vmem, size = 0x10000, scoped, tag = 'input window, operand 3, single buffered']
    #allocation9 [shape = 's32[1]{0}', space=sflag, size = 0x4, scoped, tag = 'scoped memory for tpu_custom_call.1']
    #allocation10 [shape = 'u8[32768]{0}', space=vmem, size = 0x8000, scoped, tag = 'input window, operand 5, single buffered']
    #allocation11 [shape = 'u8[16384]{0}', space=vmem, size = 0x4000, scoped, tag = 'output window, operand 0']
    %13 = vsyncpa [#allocation3], 0
    %s14 = scalar_lea.sflag [#allocation3], 1
    %15 = vsyncpa %s14, 0
    %16 = vsyncpa [#allocation6], 0
    %17 = vsyncpa [#allocation9], 0
    %18 = vsyncpa [#allocation4], 0
    %s19 = scalar_lea.sflag [#allocation4], 1
    %20 = vsyncpa %s19, 0
    loop: start=0, step=1, limit=4
    $region2: #{tpu_custom_call.1} parent=1 // loop_pre_header
      _
    $region3: #{tpu_custom_call.1} parent=1 // loop_header
      %s22 = sphi 0, %s26
      %p23 = scmp.ge.s32.totalorder %s22, 4
      %s29 = sphi 0, %s41
      %s30 = sphi 0, %s37
      %s31 = sphi 0, %s29
      %s32 = sphi 0, %s30
      %s33 = sphi 0, %s31
      %s34 = sphi 0, %s32
      %s46 = sphi 0, %s48
      %s49 = sphi 0, %s46
      %s50 = sphi 0, %s49
      %s66 = sphi 0, %s50
      %s70 = sphi 0, %s70
      %s72 = sphi 0, %s70
      %s73 = sphi 0, %s72
      %s87 = sphi 0, %s73
      %s91 = sphi 0, %s91
      %s93 = sphi 0, %s91
      %s94 = sphi 0, %s93
      %s108 = sphi 0, %s94
      %s112 = sphi 0, %s112
      %s114 = sphi 0, %s112
      %s115 = sphi 0, %s114
      %s129 = sphi 0, %s115
      %s133 = sphi 0, %s133
      %s135 = sphi 0, %s133
      %s136 = sphi 0, %s135
      %s150 = sphi 0, %s136
      %s154 = sphi 0, %s154
      %s156 = sphi 0, %s154
      %s157 = sphi 0, %s156
      %s171 = sphi 0, %s157
      %s175 = sphi 0, %s175
      %s177 = sphi 0, %s175
      %s178 = sphi 0, %s177
      %s192 = sphi 0, %s178
      %s198 = sphi 0, %s200
      %s201 = sphi 0, %s198
      %s202 = sphi 0, %s201
      %s218 = sphi 0, %s202
      %s226 = sphi 0, %s228
      %s229 = sphi 0, %s226
      %s230 = sphi 0, %s229
      %s246 = sphi 0, %s230
    $region4: #{tpu_custom_call.1} parent=1 // loop_header_branch
      %25 = sbr.rel (%p23) target = $region8
    $region5: #{tpu_custom_call.1} parent=1 // loop_body
      %s27 = ssub.s32 %s22, 1
      %s28 = ssub.s32 %s22, 2
      %s35 = sadd.s32 1, %s30
      %p36 = scmp.ge.s32.totalorder %s35, 1
      %s37 = scalar_select %p36, 0, %s35
      %s38 = sadd.s32 1, %s29
      %s39 = scalar_select %p36, %s38, %s29
      %p40 = scmp.ge.s32.totalorder %s39, 2
      %s41 = scalar_select %p40, 0, %s39
      %s42 = ssub.s32 %s29, %s41
      %s43 = ssub.s32 %s30, %s37
      %s44 = sor.u32 %s42, %s43
      %p45 = scmp.eq.s32.totalorder %s44, 0
      %s47 = sadd.s32 %s46, 1
      %s48 = scalar_select %p45, %s46, %s47
      %p51 = pneg %p45
      %p52 = scmp.eq.s32.totalorder %s22, 1
      %p53 = por %p51, %p52
      %p54 = scmp.ne.s32.totalorder %s46, %s49
      %p55 = scmp.eq.s32.totalorder %s22, 0
      %p56 = por %p54, %p55
      %p57 = scmp.ne.s32.totalorder %s46, %s49
      %p58 = scmp.eq.s32.totalorder %s27, 1
      %p59 = por %p57, %p58
      %p60 = scmp.ne.s32.totalorder %s49, %s50
      %p61 = scmp.eq.s32.totalorder %s27, 0
      %p62 = por %p60, %p61
      %p63 = scmp.ne.s32.totalorder %s49, %s50
      %p64 = scmp.eq.s32.totalorder %s28, 1
      %p65 = por %p63, %p64
      %p67 = scmp.ne.s32.totalorder %s50, %s66
      %p68 = scmp.eq.s32.totalorder %s28, 0
      %p69 = por %p67, %p68
      %s71 = sadd.s32 %s70, 1
      %p74 = scmp.eq.s32.totalorder %s22, 1
      %p75 = scmp.ne.s32.totalorder %s70, %s72
      %p76 = scmp.eq.s32.totalorder %s22, 0
      %p77 = por %p75, %p76
      %p78 = scmp.ne.s32.totalorder %s70, %s72
      %p79 = scmp.eq.s32.totalorder %s27, 1
      %p80 = por %p78, %p79
      %p81 = scmp.ne.s32.totalorder %s72, %s73
      %p82 = scmp.eq.s32.totalorder %s27, 0
      %p83 = por %p81, %p82
      %p84 = scmp.ne.s32.totalorder %s72, %s73
      %p85 = scmp.eq.s32.totalorder %s28, 1
      %p86 = por %p84, %p85
      %p88 = scmp.ne.s32.totalorder %s73, %s87
      %p89 = scmp.eq.s32.totalorder %s28, 0
      %p90 = por %p88, %p89
      %s92 = sadd.s32 %s91, 1
      %p95 = scmp.eq.s32.totalorder %s22, 1
      %p96 = scmp.ne.s32.totalorder %s91, %s93
      %p97 = scmp.eq.s32.totalorder %s22, 0
      %p98 = por %p96, %p97
      %p99 = scmp.ne.s32.totalorder %s91, %s93
      %p100 = scmp.eq.s32.totalorder %s27, 1
      %p101 = por %p99, %p100
      %p102 = scmp.ne.s32.totalorder %s93, %s94
      %p103 = scmp.eq.s32.totalorder %s27, 0
      %p104 = por %p102, %p103
      %p105 = scmp.ne.s32.totalorder %s93, %s94
      %p106 = scmp.eq.s32.totalorder %s28, 1
      %p107 = por %p105, %p106
      %p109 = scmp.ne.s32.totalorder %s94, %s108
      %p110 = scmp.eq.s32.totalorder %s28, 0
      %p111 = por %p109, %p110
      %s113 = sadd.s32 %s112, 1
      %p116 = scmp.eq.s32.totalorder %s22, 1
      %p117 = scmp.ne.s32.totalorder %s112, %s114
      %p118 = scmp.eq.s32.totalorder %s22, 0
      %p119 = por %p117, %p118
      %p120 = scmp.ne.s32.totalorder %s112, %s114
      %p121 = scmp.eq.s32.totalorder %s27, 1
      %p122 = por %p120, %p121
      %p123 = scmp.ne.s32.totalorder %s114, %s115
      %p124 = scmp.eq.s32.totalorder %s27, 0
      %p125 = por %p123, %p124
      %p126 = scmp.ne.s32.totalorder %s114, %s115
      %p127 = scmp.eq.s32.totalorder %s28, 1
      %p128 = por %p126, %p127
      %p130 = scmp.ne.s32.totalorder %s115, %s129
      %p131 = scmp.eq.s32.totalorder %s28, 0
      %p132 = por %p130, %p131
      %s134 = sadd.s32 %s133, 1
      %p137 = scmp.eq.s32.totalorder %s22, 1
      %p138 = scmp.ne.s32.totalorder %s133, %s135
      %p139 = scmp.eq.s32.totalorder %s22, 0
      %p140 = por %p138, %p139
      %p141 = scmp.ne.s32.totalorder %s133, %s135
      %p142 = scmp.eq.s32.totalorder %s27, 1
      %p143 = por %p141, %p142
      %p144 = scmp.ne.s32.totalorder %s135, %s136
      %p145 = scmp.eq.s32.totalorder %s27, 0
      %p146 = por %p144, %p145
      %p147 = scmp.ne.s32.totalorder %s135, %s136
      %p148 = scmp.eq.s32.totalorder %s28, 1
      %p149 = por %p147, %p148
      %p151 = scmp.ne.s32.totalorder %s136, %s150
      %p152 = scmp.eq.s32.totalorder %s28, 0
      %p153 = por %p151, %p152
      %s155 = sadd.s32 %s154, 1
      %p158 = scmp.eq.s32.totalorder %s22, 1
      %p159 = scmp.ne.s32.totalorder %s154, %s156
      %p160 = scmp.eq.s32.totalorder %s22, 0
      %p161 = por %p159, %p160
      %p162 = scmp.ne.s32.totalorder %s154, %s156
      %p163 = scmp.eq.s32.totalorder %s27, 1
      %p164 = por %p162, %p163
      %p165 = scmp.ne.s32.totalorder %s156, %s157
      %p166 = scmp.eq.s32.totalorder %s27, 0
      %p167 = por %p165, %p166
      %p168 = scmp.ne.s32.totalorder %s156, %s157
      %p169 = scmp.eq.s32.totalorder %s28, 1
      %p170 = por %p168, %p169
      %p172 = scmp.ne.s32.totalorder %s157, %s171
      %p173 = scmp.eq.s32.totalorder %s28, 0
      %p174 = por %p172, %p173
      %s176 = sadd.s32 %s175, 1
      %p179 = scmp.eq.s32.totalorder %s22, 1
      %p180 = scmp.ne.s32.totalorder %s175, %s177
      %p181 = scmp.eq.s32.totalorder %s22, 0
      %p182 = por %p180, %p181
      %p183 = scmp.ne.s32.totalorder %s175, %s177
      %p184 = scmp.eq.s32.totalorder %s27, 1
      %p185 = por %p183, %p184
      %p186 = scmp.ne.s32.totalorder %s177, %s178
      %p187 = scmp.eq.s32.totalorder %s27, 0
      %p188 = por %p186, %p187
      %p189 = scmp.ne.s32.totalorder %s177, %s178
      %p190 = scmp.eq.s32.totalorder %s28, 1
      %p191 = por %p189, %p190
      %p193 = scmp.ne.s32.totalorder %s178, %s192
      %p194 = scmp.eq.s32.totalorder %s28, 0
      %p195 = por %p193, %p194
      %s196 = ssub.s32 %s29, %s41
      %p197 = scmp.eq.s32.totalorder %s196, 0
      %s199 = sadd.s32 %s198, 1
      %s200 = scalar_select %p197, %s198, %s199
      %p203 = pneg %p197
      %p204 = scmp.eq.s32.totalorder %s22, 1
      %p205 = por %p203, %p204
      %p206 = scmp.ne.s32.totalorder %s198, %s201
      %p207 = scmp.eq.s32.totalorder %s22, 0
      %p208 = por %p206, %p207
      %p209 = scmp.ne.s32.totalorder %s198, %s201
      %p210 = scmp.eq.s32.totalorder %s27, 1
      %p211 = por %p209, %p210
      %p212 = scmp.ne.s32.totalorder %s201, %s202
      %p213 = scmp.eq.s32.totalorder %s27, 0
      %p214 = por %p212, %p213
      %p215 = scmp.ne.s32.totalorder %s201, %s202
      %p216 = scmp.eq.s32.totalorder %s28, 1
      %p217 = por %p215, %p216
      %p219 = scmp.ne.s32.totalorder %s202, %s218
      %p220 = scmp.eq.s32.totalorder %s28, 0
      %p221 = por %p219, %p220
      %s222 = ssub.s32 %s29, %s41
      %s223 = ssub.s32 %s30, %s37
      %s224 = sor.u32 %s222, %s223
      %p225 = scmp.eq.s32.totalorder %s224, 0
      %s227 = sadd.s32 %s226, 1
      %s228 = scalar_select %p225, %s226, %s227
      %p231 = pneg %p225
      %p232 = scmp.eq.s32.totalorder %s22, 1
      %p233 = por %p231, %p232
      %p234 = scmp.ne.s32.totalorder %s226, %s229
      %p235 = scmp.eq.s32.totalorder %s22, 0
      %p236 = por %p234, %p235
      %p237 = scmp.ne.s32.totalorder %s226, %s229
      %p238 = scmp.eq.s32.totalorder %s27, 1
      %p239 = por %p237, %p238
      %p240 = scmp.ne.s32.totalorder %s229, %s230
      %p241 = scmp.eq.s32.totalorder %s27, 0
      %p242 = por %p240, %p241
      %p243 = scmp.ne.s32.totalorder %s229, %s230
      %p244 = scmp.eq.s32.totalorder %s28, 1
      %p245 = por %p243, %p244
      %p247 = scmp.ne.s32.totalorder %s230, %s246
      %p248 = scmp.eq.s32.totalorder %s28, 0
      %p249 = por %p247, %p248
      %p250 = scmp.le.s32.totalorder 1, %s22
      %p251 = scmp.lt.s32.totalorder %s22, 3
      %p252 = pnand %p250, %p251
      %p253 = pneg %p252
      // Predicated region
      $region9: #{tpu_custom_call.1} parent=5 // pred_check
        _
      $region10: #{tpu_custom_call.1} parent=5 // pred_check_branch
        %255 = sbr.rel (%p252) target = $region12
      $region11: #{tpu_custom_call.1} parent=5 // pred_region
        %s256 = ssub.s32 %s22, 1
        // Predicated region
        $region13: #{tpu_custom_call.1} parent=11 // pred_check
          %p257 = pneg %p83
        $region14: #{tpu_custom_call.1} parent=11 // pred_check_branch
          %259 = sbr.rel (%p257) target = $region16
        $region15: #{tpu_custom_call.1} parent=11 // pred_region
          %261 = vsyncadd [#allocation6], 0
          %s262 = sshll.u32 %s1, 4
          %s263 = int_to_ptr.hbm [resolvable:$true] %s262
          %s264 = sshll.u32 [#allocation5], 4
          %s265 = int_to_ptr.vmem [resolvable:$true] %s264
          %270 = dma.hbm_to_vmem [thread:$0]  %s263, 2048, %s265, [#allocation6], 128, 128, 8
        $region16: #{tpu_custom_call.1} parent=11 // pred_fallthru
          _
        // Predicated region
        $region17: #{tpu_custom_call.1} parent=11 // pred_check
          %p271 = pneg %p104
        $region18: #{tpu_custom_call.1} parent=11 // pred_check_branch
          %273 = sbr.rel (%p271) target = $region20
        $region19: #{tpu_custom_call.1} parent=11 // pred_region
          %275 = vsyncadd [#allocation6], 0
          %s277 = sshll.u32 %s2, 4
          %s278 = int_to_ptr.hbm [resolvable:$true] %s277
          %s279 = sshll.u32 [#allocation7], 4
          %s280 = int_to_ptr.vmem [resolvable:$true] %s279
          %282 = dma.hbm_to_vmem [thread:$0]  %s278, 32, %s280, [#allocation6]
        $region20: #{tpu_custom_call.1} parent=11 // pred_fallthru
          _
        // Predicated region
        $region21: #{tpu_custom_call.1} parent=11 // pred_check
          %p283 = pneg %p125
        $region22: #{tpu_custom_call.1} parent=11 // pred_check_branch
          %285 = sbr.rel (%p283) target = $region24
        $region23: #{tpu_custom_call.1} parent=11 // pred_region
          %287 = vsyncadd [#allocation9], 0
          %s288 = sshll.u32 %s3, 4
          %s289 = int_to_ptr.hbm [resolvable:$true] %s288
          %s290 = sshll.u32 [#allocation8], 4
          %s291 = int_to_ptr.vmem [resolvable:$true] %s290
          %296 = dma.hbm_to_vmem [thread:$0]  %s289, 2048, %s291, [#allocation9], 64, 64, 4
        $region24: #{tpu_custom_call.1} parent=11 // pred_fallthru
          _
        // Predicated region
        $region25: #{tpu_custom_call.1} parent=11 // pred_check
          %p297 = pneg %p146
        $region26: #{tpu_custom_call.1} parent=11 // pred_check_branch
          %299 = sbr.rel (%p297) target = $region28
        $region27: #{tpu_custom_call.1} parent=11 // pred_region
          _
        $region28: #{tpu_custom_call.1} parent=11 // pred_fallthru
          _
        // Predicated region
        $region29: #{tpu_custom_call.1} parent=11 // pred_check
          %p300 = pneg %p167
        $region30: #{tpu_custom_call.1} parent=11 // pred_check_branch
          %302 = sbr.rel (%p300) target = $region32
        $region31: #{tpu_custom_call.1} parent=11 // pred_region
          %304 = vsyncadd [#allocation9], 0
          %s305 = sshll.u32 %s5, 4
          %s306 = int_to_ptr.hbm [resolvable:$true] %s305
          %s307 = sshll.u32 [#allocation10], 4
          %s308 = int_to_ptr.vmem [resolvable:$true] %s307
          %313 = dma.hbm_to_vmem [thread:$0]  %s306, 1024, %s308, [#allocation9], 64, 64, 4
        $region32: #{tpu_custom_call.1} parent=11 // pred_fallthru
          _
        // Predicated region
        $region33: #{tpu_custom_call.1} parent=11 // pred_check
          %p314 = pneg %p188
        $region34: #{tpu_custom_call.1} parent=11 // pred_check_branch
          %316 = sbr.rel (%p314) target = $region36
        $region35: #{tpu_custom_call.1} parent=11 // pred_region
          _
        $region36: #{tpu_custom_call.1} parent=11 // pred_fallthru
          _
      $region12: #{tpu_custom_call.1} parent=5 // pred_fallthru
        _
      %p317 = scmp.lt.s32.totalorder %s22, 2
      // Predicated region
      $region37: #{tpu_custom_call.1} parent=5 // pred_check
        %p318 = pneg %p317
      $region38: #{tpu_custom_call.1} parent=5 // pred_check_branch
        %320 = sbr.rel (%p318) target = $region40
      $region39: #{tpu_custom_call.1} parent=5 // pred_region
        // Predicated region
        $region41: #{tpu_custom_call.1} parent=39 // pred_check
          %p321 = pneg %p56
        $region42: #{tpu_custom_call.1} parent=39 // pred_check_branch
          %323 = sbr.rel (%p321) target = $region44
        $region43: #{tpu_custom_call.1} parent=39 // pred_region
          %s324 = sand.u32 %s46, 1
          %s325 = scalar_lea.sflag [#allocation3], %s324
          %s326 = sand.u32 %s46, 1
          %s327 = smul.addr %s326, 8
          %s328 = scalar_lea.vmem [#allocation2], %s327
          %330 = vsyncadd %s325, 0
          %s331 = sadd.s32 %s30, %s29
          %s332 = smul.addr %s331, 8
          %s333 = scalar_lea.hbm %s0, %s332
          %s335 = sshll.u32 %s333, 4
          %s336 = int_to_ptr.hbm [resolvable:$true] %s335
          %s337 = sshll.u32 %s328, 4
          %s338 = int_to_ptr.vmem [resolvable:$true] %s337
          %340 = dma.hbm_to_vmem [thread:$0]  %s336, 128, %s338, %s325
        $region44: #{tpu_custom_call.1} parent=39 // pred_fallthru
          _
        // Predicated region
        $region45: #{tpu_custom_call.1} parent=39 // pred_check
          %p341 = pneg %p208
        $region46: #{tpu_custom_call.1} parent=39 // pred_check_branch
          %343 = sbr.rel (%p341) target = $region48
        $region47: #{tpu_custom_call.1} parent=39 // pred_region
          %p344 = scmp.lt.s32.totalorder %s29, 1
          %s345 = scalar_select %p344, %s29, 1
          %s346 = scalar_lea.vmem %s7, %s345
        $region48: #{tpu_custom_call.1} parent=39 // pred_fallthru
          _
      $region40: #{tpu_custom_call.1} parent=5 // pred_fallthru
        _
      %p347 = scmp.le.s32.totalorder 1, %s22
      %p348 = scmp.lt.s32.totalorder %s22, 3
      %p349 = pnand %p347, %p348
      %p350 = pneg %p349
      // Predicated region
      $region49: #{tpu_custom_call.1} parent=5 // pred_check
        _
      $region50: #{tpu_custom_call.1} parent=5 // pred_check_branch
        %352 = sbr.rel (%p349) target = $region52
      $region51: #{tpu_custom_call.1} parent=5 // pred_region
        %s353 = ssub.s32 %s22, 1
        %s354 = sand.u32 %s49, 1
        %s355 = scalar_lea.sflag [#allocation3], %s354
        %s356 = sand.u32 %s49, 1
        %s357 = smul.addr %s356, 8
        %s358 = scalar_lea.vmem [#allocation2], %s357
        // Predicated region
        $region53: #{tpu_custom_call.1} parent=51 // pred_check
          %p359 = pneg %p62
        $region54: #{tpu_custom_call.1} parent=51 // pred_check_branch
          %361 = sbr.rel (%p359) target = $region56
        $region55: #{tpu_custom_call.1} parent=51 // pred_region
          %363 = dma.done %s355, 128
        $region56: #{tpu_custom_call.1} parent=51 // pred_fallthru
          _
        // Predicated region
        $region57: #{tpu_custom_call.1} parent=51 // pred_check
          %p364 = pneg %p83
        $region58: #{tpu_custom_call.1} parent=51 // pred_check_branch
          %366 = sbr.rel (%p364) target = $region60
        $region59: #{tpu_custom_call.1} parent=51 // pred_region
          %368 = dma.done [#allocation6], 2048
        $region60: #{tpu_custom_call.1} parent=51 // pred_fallthru
          _
        // Predicated region
        $region61: #{tpu_custom_call.1} parent=51 // pred_check
          %p369 = pneg %p104
        $region62: #{tpu_custom_call.1} parent=51 // pred_check_branch
          %371 = sbr.rel (%p369) target = $region64
        $region63: #{tpu_custom_call.1} parent=51 // pred_region
          %373 = dma.done [#allocation6], 32
        $region64: #{tpu_custom_call.1} parent=51 // pred_fallthru
          _
        // Predicated region
        $region65: #{tpu_custom_call.1} parent=51 // pred_check
          %p374 = pneg %p125
        $region66: #{tpu_custom_call.1} parent=51 // pred_check_branch
          %376 = sbr.rel (%p374) target = $region68
        $region67: #{tpu_custom_call.1} parent=51 // pred_region
          %378 = dma.done [#allocation9], 2048
        $region68: #{tpu_custom_call.1} parent=51 // pred_fallthru
          _
        // Predicated region
        $region69: #{tpu_custom_call.1} parent=51 // pred_check
          %p379 = pneg %p167
        $region70: #{tpu_custom_call.1} parent=51 // pred_check_branch
          %381 = sbr.rel (%p379) target = $region72
        $region71: #{tpu_custom_call.1} parent=51 // pred_region
          %383 = dma.done [#allocation9], 1024
        $region72: #{tpu_custom_call.1} parent=51 // pred_fallthru
          _
        %s384 = sand.u32 %s49, 1
        %s385 = scalar_lea.sflag [#allocation3], %s384
        %s386 = sand.u32 %s49, 1
        %s387 = smul.addr %s386, 8
        %s388 = scalar_lea.vmem [#allocation2], %s387
        %p389 = pneg %p62
        %p390 = pneg %p59
        %p391 = pneg %p83
        %p392 = pneg %p80
        %p393 = pneg %p104
        %p394 = pneg %p101
        %p395 = pneg %p125
        %p396 = pneg %p122
        %p397 = pneg %p146
        %p398 = pneg %p143
        %p399 = pneg %p167
        %p400 = pneg %p164
        %p401 = pneg %p188
        %p402 = pneg %p185
        %p403 = scmp.lt.s32.totalorder %s31, 1
        %s404 = scalar_select %p403, %s31, 1
        %s405 = scalar_lea.vmem %s7, %s404
        %p406 = pneg %p214
        %p407 = pneg %p211
        %p408 = pneg %p242
        %p409 = pneg %p239
        %s410 = sand.u32 %s229, 1
        %s411 = scalar_lea.sflag [#allocation4], %s410
        %s412 = sand.u32 %s229, 1
        %s413 = smul.addr %s412, 16
        %s414 = scalar_lea.vmem [#allocation11], %s413
        %p415 = scmp.lt.s32.totalorder %s31, 1
        %s416 = scalar_select %p415, %s31, 1
        %s417 = scalar_lea.vmem %s7, %s416
        %v418 = vld [vmem:[%s358] sm:$0xff]
        %v419 = vpack.c.bf16 %v418, %v418
        %v420 = vld [vmem:[#allocation5] sm:$0xff]
        %v421 = vld [vmem:[#allocation5 + $0x8] sm:$0xff]
        %v422 = vld [vmem:[#allocation5 + $0x10] sm:$0xff]
        %v423 = vld [vmem:[#allocation5 + $0x18] sm:$0xff]
        %v424 = vld [vmem:[#allocation5 + $0x20] sm:$0xff]
        %v425 = vld [vmem:[#allocation5 + $0x28] sm:$0xff]
        %v426 = vld [vmem:[#allocation5 + $0x30] sm:$0xff]
        %v427 = vld [vmem:[#allocation5 + $0x38] sm:$0xff]
        %v428 = vld [vmem:[#allocation5 + $0x40] sm:$0xff]
        %v429 = vld [vmem:[#allocation5 + $0x48] sm:$0xff]
        %v430 = vld [vmem:[#allocation5 + $0x50] sm:$0xff]
        %v431 = vld [vmem:[#allocation5 + $0x58] sm:$0xff]
        %v432 = vld [vmem:[#allocation5 + $0x60] sm:$0xff]
        %v433 = vld [vmem:[#allocation5 + $0x68] sm:$0xff]
        %v434 = vld [vmem:[#allocation5 + $0x70] sm:$0xff]
        %v435 = vld [vmem:[#allocation5 + $0x78] sm:$0xff]
        %v436 = vld [vmem:[#allocation7] sm:$0x3]
        %v438 = vperm.slane %v436, 0
        %v439 = vperm.slane %v436, 1
        %v458 = vunpack.c.l.b16 %v420
        %v459 = vunpack.c.h.b16 %v420
        %v460 = vunpack.c.l.b16 %v421
        %v461 = vunpack.c.h.b16 %v421
        %v462 = vunpack.c.l.b16 %v422
        %v463 = vunpack.c.h.b16 %v422
        %v464 = vunpack.c.l.b16 %v423
        %v465 = vunpack.c.h.b16 %v423
        %v466 = vunpack.c.l.b16 %v424
        %v467 = vunpack.c.h.b16 %v424
        %v468 = vunpack.c.l.b16 %v425
        %v469 = vunpack.c.h.b16 %v425
        %v470 = vunpack.c.l.b16 %v426
        %v471 = vunpack.c.h.b16 %v426
        %v472 = vunpack.c.l.b16 %v427
        %v473 = vunpack.c.h.b16 %v427
        %v474 = vunpack.c.l.b16 %v428
        %v475 = vunpack.c.h.b16 %v428
        %v476 = vunpack.c.l.b16 %v429
        %v477 = vunpack.c.h.b16 %v429
        %v478 = vunpack.c.l.b16 %v430
        %v479 = vunpack.c.h.b16 %v430
        %v480 = vunpack.c.l.b16 %v431
        %v481 = vunpack.c.h.b16 %v431
        %v482 = vunpack.c.l.b16 %v432
        %v483 = vunpack.c.h.b16 %v432
        %v484 = vunpack.c.l.b16 %v433
        %v485 = vunpack.c.h.b16 %v433
        %v486 = vunpack.c.l.b16 %v434
        %v487 = vunpack.c.h.b16 %v434
        %v488 = vunpack.c.l.b16 %v435
        %v489 = vunpack.c.h.b16 %v435
        %v490 = vpack.c.b16 %v460, %v458
        %v491 = vpack.c.b16 %v461, %v459
        %v492 = vpack.c.b16 %v464, %v462
        %v493 = vpack.c.b16 %v465, %v463
        %v494 = vpack.c.b16 %v468, %v466
        %v495 = vpack.c.b16 %v469, %v467
        %v496 = vpack.c.b16 %v472, %v470
        %v497 = vpack.c.b16 %v473, %v471
        %v498 = vpack.c.b16 %v476, %v474
        %v499 = vpack.c.b16 %v477, %v475
        %v500 = vpack.c.b16 %v480, %v478
        %v501 = vpack.c.b16 %v481, %v479
        %v502 = vpack.c.b16 %v484, %v482
        %v503 = vpack.c.b16 %v485, %v483
        %v504 = vpack.c.b16 %v488, %v486
        %v505 = vpack.c.b16 %v489, %v487
        %522 = vmatpush.bf16.msra.mxu0 %v504
        %523 = vmatpush.bf16.msra.mxu0 %v502
        %524 = vmatpush.bf16.msra.mxu0 %v500
        %525 = vmatpush.bf16.msra.mxu0 %v498
        %526 = vmatpush.bf16.msra.mxu0 %v496
        %527 = vmatpush.bf16.msra.mxu0 %v494
        %528 = vmatpush.bf16.msra.mxu0 %v492
        %529 = vmatpush.bf16.msra.mxu0 %v490
        %530 = vmatmul.bf16.gmra.mxu0 %v419
        %v531 = vpop.f32.mrf.mxu0
        %v532 = vadd.f32 %v438, %v531
        %v533 = vpop.f32.mrf.mxu0
        %534 = vdwg.mxu0
        %535 = vmatpush.bf16.msra.mxu0 %v505
        %536 = vmatpush.bf16.msra.mxu0 %v503
        %537 = vmatpush.bf16.msra.mxu0 %v501
        %538 = vmatpush.bf16.msra.mxu0 %v499
        %539 = vmatpush.bf16.msra.mxu0 %v497
        %540 = vmatpush.bf16.msra.mxu0 %v495
        %541 = vmatpush.bf16.msra.mxu0 %v493
        %542 = vmatpush.bf16.msra.mxu0 %v491
        %543 = vmatmul.bf16.gmra.mxu0 %v419
        %v544 = vpop.f32.mrf.mxu0
        %v545 = vadd.f32 %v439, %v544
        %v546 = vpop.f32.mrf.mxu0
        %547 = vdwg.mxu0
        %v548 = vmul.f32 %v532, %v532
        %v549 = vmul.f32 %v545, %v545
        %v550 = vmul.f32 %v532, %v548
        %v551 = vmul.f32 %v545, %v549
        %v552 = vmul.f32 %v550, 0.044715
        %v553 = vmul.f32 %v551, 0.044715
        %v554 = vadd.f32 %v532, %v552
        %v555 = vadd.f32 %v545, %v553
        %v556 = vmul.f32 %v554, 0.7978846
        %v557 = vmul.f32 %v555, 0.7978846
        %v558 = vtanh.pop %v556
        %v559 = vtanh.pop %v557
        %v560 = vadd.f32 %v558, 1.0
        %v561 = vadd.f32 %v559, 1.0
        %v562 = vmul.f32 %v560, 0.5
        %v563 = vmul.f32 %v561, 0.5
        %v564 = vmul.f32 %v532, %v562
        %v565 = vmul.f32 %v545, %v563
        %v566 = vpack.c.bf16 %v564, %v564
        %v567 = vpack.c.bf16 %v565, %v565
        %v568 = vld [vmem:[#allocation8] sm:$0xf]
        %v569 = vld [vmem:[#allocation8 + $0x4] sm:$0xf]
        %v570 = vld [vmem:[#allocation8 + $0x8] sm:$0xf]
        %v571 = vld [vmem:[#allocation8 + $0xc] sm:$0xf]
        %v572 = vld [vmem:[#allocation8 + $0x10] sm:$0xf]
        %v573 = vld [vmem:[#allocation8 + $0x14] sm:$0xf]
        %v574 = vld [vmem:[#allocation8 + $0x18] sm:$0xf]
        %v575 = vld [vmem:[#allocation8 + $0x1c] sm:$0xf]
        %v576 = vld [vmem:[#allocation8 + $0x20] sm:$0xf]
        %v577 = vld [vmem:[#allocation8 + $0x24] sm:$0xf]
        %v578 = vld [vmem:[#allocation8 + $0x28] sm:$0xf]
        %v579 = vld [vmem:[#allocation8 + $0x2c] sm:$0xf]
        %v580 = vld [vmem:[#allocation8 + $0x30] sm:$0xf]
        %v581 = vld [vmem:[#allocation8 + $0x34] sm:$0xf]
        %v582 = vld [vmem:[#allocation8 + $0x38] sm:$0xf]
        %v583 = vld [vmem:[#allocation8 + $0x3c] sm:$0xf]
        %v584 = vld [vmem:[#allocation8 + $0x40] sm:$0xf]
        %v585 = vld [vmem:[#allocation8 + $0x44] sm:$0xf]
        %v586 = vld [vmem:[#allocation8 + $0x48] sm:$0xf]
        %v587 = vld [vmem:[#allocation8 + $0x4c] sm:$0xf]
        %v588 = vld [vmem:[#allocation8 + $0x50] sm:$0xf]
        %v589 = vld [vmem:[#allocation8 + $0x54] sm:$0xf]
        %v590 = vld [vmem:[#allocation8 + $0x58] sm:$0xf]
        %v591 = vld [vmem:[#allocation8 + $0x5c] sm:$0xf]
        %v592 = vld [vmem:[#allocation8 + $0x60] sm:$0xf]
        %v593 = vld [vmem:[#allocation8 + $0x64] sm:$0xf]
        %v594 = vld [vmem:[#allocation8 + $0x68] sm:$0xf]
        %v595 = vld [vmem:[#allocation8 + $0x6c] sm:$0xf]
        %v596 = vld [vmem:[#allocation8 + $0x70] sm:$0xf]
        %v597 = vld [vmem:[#allocation8 + $0x74] sm:$0xf]
        %v598 = vld [vmem:[#allocation8 + $0x78] sm:$0xf]
        %v599 = vld [vmem:[#allocation8 + $0x7c] sm:$0xf]
        %v632 = vunpack.c.l.b16 %v568
        %v633 = vunpack.c.l.b16 %v569
        %v634 = vunpack.c.l.b16 %v570
        %v635 = vunpack.c.l.b16 %v571
        %v636 = vunpack.c.l.b16 %v572
        %v637 = vunpack.c.l.b16 %v573
        %v638 = vunpack.c.l.b16 %v574
        %v639 = vunpack.c.l.b16 %v575
        %v640 = vunpack.c.l.b16 %v576
        %v641 = vunpack.c.l.b16 %v577
        %v642 = vunpack.c.l.b16 %v578
        %v643 = vunpack.c.l.b16 %v579
        %v644 = vunpack.c.l.b16 %v580
        %v645 = vunpack.c.l.b16 %v581
        %v646 = vunpack.c.l.b16 %v582
        %v647 = vunpack.c.l.b16 %v583
        %v648 = vunpack.c.l.b16 %v584
        %v649 = vunpack.c.l.b16 %v585
        %v650 = vunpack.c.l.b16 %v586
        %v651 = vunpack.c.l.b16 %v587
        %v652 = vunpack.c.l.b16 %v588
        %v653 = vunpack.c.l.b16 %v589
        %v654 = vunpack.c.l.b16 %v590
        %v655 = vunpack.c.l.b16 %v591
        %v656 = vunpack.c.l.b16 %v592
        %v657 = vunpack.c.l.b16 %v593
        %v658 = vunpack.c.l.b16 %v594
        %v659 = vunpack.c.l.b16 %v595
        %v660 = vunpack.c.l.b16 %v596
        %v661 = vunpack.c.l.b16 %v597
        %v662 = vunpack.c.l.b16 %v598
        %v663 = vunpack.c.l.b16 %v599
        %v664 = vpack.c.b16 %v633, %v632
        %v665 = vpack.c.b16 %v635, %v634
        %v666 = vpack.c.b16 %v637, %v636
        %v667 = vpack.c.b16 %v639, %v638
        %v668 = vpack.c.b16 %v641, %v640
        %v669 = vpack.c.b16 %v643, %v642
        %v670 = vpack.c.b16 %v645, %v644
        %v671 = vpack.c.b16 %v647, %v646
        %v672 = vpack.c.b16 %v649, %v648
        %v673 = vpack.c.b16 %v651, %v650
        %v674 = vpack.c.b16 %v653, %v652
        %v675 = vpack.c.b16 %v655, %v654
        %v676 = vpack.c.b16 %v657, %v656
        %v677 = vpack.c.b16 %v659, %v658
        %v678 = vpack.c.b16 %v661, %v660
        %v679 = vpack.c.b16 %v663, %v662
        %696 = vmatpush.bf16.msra.mxu0 %v671
        %697 = vmatpush.bf16.msra.mxu0 %v670
        %698 = vmatpush.bf16.msra.mxu0 %v669
        %699 = vmatpush.bf16.msra.mxu0 %v668
        %700 = vmatpush.bf16.msra.mxu0 %v667
        %701 = vmatpush.bf16.msra.mxu0 %v666
        %702 = vmatpush.bf16.msra.mxu0 %v665
        %703 = vmatpush.bf16.msra.mxu0 %v664
        %704 = vmatmul.bf16.gmra.mxu0 %v566
        %v705 = vpop.f32.mrf.mxu0
        %v706 = vadd.f32 0.0, %v705
        %v707 = vpop.f32.mrf.mxu0
        %708 = vdwg.mxu0
        %709 = vmatpush.bf16.msra.mxu0 %v679
        %710 = vmatpush.bf16.msra.mxu0 %v678
        %711 = vmatpush.bf16.msra.mxu0 %v677
        %712 = vmatpush.bf16.msra.mxu0 %v676
        %713 = vmatpush.bf16.msra.mxu0 %v675
        %714 = vmatpush.bf16.msra.mxu0 %v674
        %715 = vmatpush.bf16.msra.mxu0 %v673
        %716 = vmatpush.bf16.msra.mxu0 %v672
        %717 = vmatmul.bf16.gmra.mxu0 %v567
        %v718 = vpop.f32.mrf.mxu0
        %v719 = vadd.f32 %v706, %v718
        %v720 = vpop.f32.mrf.mxu0
        %721 = vdwg.mxu0
        %v722 = vadd.f32 %v418, %v719
        %v723 = vld [vmem:[%s4] sm:$0x1]
        %v725 = vperm.slane %v723, 0
        %v727 = vadd.f32 %v722, %v725
        %v728 = vpack.c.bf16 %v727, %v727
        %v729 = vld [vmem:[#allocation10] sm:$0xf]
        %v730 = vld [vmem:[#allocation10 + $0x4] sm:$0xf]
        %v731 = vld [vmem:[#allocation10 + $0x8] sm:$0xf]
        %v732 = vld [vmem:[#allocation10 + $0xc] sm:$0xf]
        %v733 = vld [vmem:[#allocation10 + $0x10] sm:$0xf]
        %v734 = vld [vmem:[#allocation10 + $0x14] sm:$0xf]
        %v735 = vld [vmem:[#allocation10 + $0x18] sm:$0xf]
        %v736 = vld [vmem:[#allocation10 + $0x1c] sm:$0xf]
        %v737 = vld [vmem:[#allocation10 + $0x20] sm:$0xf]
        %v738 = vld [vmem:[#allocation10 + $0x24] sm:$0xf]
        %v739 = vld [vmem:[#allocation10 + $0x28] sm:$0xf]
        %v740 = vld [vmem:[#allocation10 + $0x2c] sm:$0xf]
        %v741 = vld [vmem:[#allocation10 + $0x30] sm:$0xf]
        %v742 = vld [vmem:[#allocation10 + $0x34] sm:$0xf]
        %v743 = vld [vmem:[#allocation10 + $0x38] sm:$0xf]
        %v744 = vld [vmem:[#allocation10 + $0x3c] sm:$0xf]
        %v745 = vld [vmem:[%s6] sm:$0x1]
        %v747 = vperm.slane %v745, 0
        %v765 = vunpack.c.l.b16 %v729
        %v766 = vunpack.c.l.b16 %v730
        %v767 = vunpack.c.l.b16 %v731
        %v768 = vunpack.c.l.b16 %v732
        %v769 = vunpack.c.l.b16 %v733
        %v770 = vunpack.c.l.b16 %v734
        %v771 = vunpack.c.l.b16 %v735
        %v772 = vunpack.c.l.b16 %v736
        %v773 = vunpack.c.l.b16 %v737
        %v774 = vunpack.c.l.b16 %v738
        %v775 = vunpack.c.l.b16 %v739
        %v776 = vunpack.c.l.b16 %v740
        %v777 = vunpack.c.l.b16 %v741
        %v778 = vunpack.c.l.b16 %v742
        %v779 = vunpack.c.l.b16 %v743
        %v780 = vunpack.c.l.b16 %v744
        %v781 = vpack.c.b16 %v766, %v765
        %v782 = vpack.c.b16 %v768, %v767
        %v783 = vpack.c.b16 %v770, %v769
        %v784 = vpack.c.b16 %v772, %v771
        %v785 = vpack.c.b16 %v774, %v773
        %v786 = vpack.c.b16 %v776, %v775
        %v787 = vpack.c.b16 %v778, %v777
        %v788 = vpack.c.b16 %v780, %v779
        %797 = vmatpush.bf16.msra.mxu0 %v788
        %798 = vmatpush.bf16.msra.mxu0 %v787
        %799 = vmatpush.bf16.msra.mxu0 %v786
        %800 = vmatpush.bf16.msra.mxu0 %v785
        %801 = vmatpush.bf16.msra.mxu0 %v784
        %802 = vmatpush.bf16.msra.mxu0 %v783
        %803 = vmatpush.bf16.msra.mxu0 %v782
        %804 = vmatpush.bf16.msra.mxu0 %v781
        %805 = vmatmul.bf16.gmra.mxu0 %v728
        %v806 = vpop.f32.mrf.mxu0
        %v807 = vadd.f32 %v747, %v806
        %v808 = vpop.f32.mrf.mxu0
        %809 = vdwg.mxu0
        %v810 = vld [vmem:[%s417] sm:$0x1]
        %v812 = vperm.slane %v810, 0
        %v814 = vadd.f32 %v807, %v812
        %815 = vst [vmem:[%s414] sm:$0xff] %v814
        %816 = vst [vmem:[%s414 + $0x8] sm:$0xff] %v814
        %s817 = sand.u32 %s229, 1
        %s818 = scalar_lea.sflag [#allocation4], %s817
        %s819 = sand.u32 %s229, 1
        %s820 = smul.addr %s819, 16
        %s821 = scalar_lea.vmem [#allocation11], %s820
        // Predicated region
        $region73: #{tpu_custom_call.1} parent=51 // pred_check
          %p822 = pneg %p239
        $region74: #{tpu_custom_call.1} parent=51 // pred_check_branch
          %824 = sbr.rel (%p822) target = $region76
        $region75: #{tpu_custom_call.1} parent=51 // pred_region
          %826 = vsyncadd %s818, 0
          %s827 = smul.addr %s32, 2
          %s828 = smul.addr %s31, 2
          %s829 = sadd.s32 %s827, %s828
          %s830 = smul.addr %s829, 8
          %s831 = scalar_lea.hbm %s8, %s830
          %s833 = sshll.u32 %s821, 4
          %s834 = int_to_ptr.vmem [resolvable:$true] %s833
          %s835 = sshll.u32 %s831, 4
          %s836 = int_to_ptr.hbm [resolvable:$true] %s835
          %838 = dma.vmem_to_hbm [thread:$0]  %s834, 256, %s836, %s818
        $region76: #{tpu_custom_call.1} parent=51 // pred_fallthru
          _
      $region52: #{tpu_custom_call.1} parent=5 // pred_fallthru
        _
      %p839 = scmp.le.s32.totalorder 2, %s22
      // Predicated region
      $region77: #{tpu_custom_call.1} parent=5 // pred_check
        %p840 = pneg %p839
      $region78: #{tpu_custom_call.1} parent=5 // pred_check_branch
        %842 = sbr.rel (%p840) target = $region80
      $region79: #{tpu_custom_call.1} parent=5 // pred_region
        %s843 = ssub.s32 %s22, 2
        // Predicated region
        $region81: #{tpu_custom_call.1} parent=79 // pred_check
          %p844 = pneg %p245
        $region82: #{tpu_custom_call.1} parent=79 // pred_check_branch
          %846 = sbr.rel (%p844) target = $region84
        $region83: #{tpu_custom_call.1} parent=79 // pred_region
          %s847 = sand.u32 %s230, 1
          %s848 = scalar_lea.sflag [#allocation4], %s847
          %s849 = sand.u32 %s230, 1
          %s850 = smul.addr %s849, 16
          %s851 = scalar_lea.vmem [#allocation11], %s850
          %853 = dma.done %s848, 256
        $region84: #{tpu_custom_call.1} parent=79 // pred_fallthru
          _
      $region80: #{tpu_custom_call.1} parent=5 // pred_fallthru
        _
    $region6: #{tpu_custom_call.1} parent=1 // loop_footer
      %s26 = sadd.s32 1, %s22
    $region7: #{tpu_custom_call.1} parent=1 // loop_footer_branch
      %21 = sbr.rel target = $region3
    $region8: #{tpu_custom_call.1} parent=1 // loop_exit
      _
    %854 = vsyncpa [#allocation3], 1
    %s855 = scalar_lea.sflag [#allocation3], 1
    %856 = vsyncpa %s855, 1
    %857 = vsyncpa [#allocation6], 1
    %858 = vsyncpa [#allocation9], 1
    %859 = vsyncpa [#allocation4], 1
    %s860 = scalar_lea.sflag [#allocation4], 1
    %861 = vsyncpa %s860, 1

</llo_original>
